<compile_context>
chip_gen: v5e
topology: v5e:2x2
jax: 0.10.0
libtpu: 0.0.40
codegen_flags: <defaults>
</compile_context>

<pallas_src>
import functools

import jax
import jax.numpy as jnp
from jax.experimental import pallas as pl
from jax.experimental.pallas import tpu as pltpu


def _head_kernel(ignore_index, x_ref, w_ref, b_ref, labels_ref,
                 loss_ref, preds_cls_ref, pos_ref):
    # x: [bm, H] (any float dtype), w: [H, 2], b: [1, 2] f32, labels: [bm, 1] i32
    # Cast to bf16 *in VMEM* (post-DMA) so HBM traffic matches the producer's dtype.
    x = x_ref[...].astype(jnp.bfloat16)
    w = w_ref[...].astype(jnp.bfloat16)
    logits = jnp.dot(x, w, preferred_element_type=jnp.float32) + b_ref[...]  # [bm, 2] f32

    l0 = logits[:, 0:1]                                   # [bm, 1]
    l1 = logits[:, 1:2]                                   # [bm, 1]
    d = l1 - l0

    # --- CrossEntropyLoss, specialized for C == 2 (pure VPU/EUP, f32) ---
    # logsumexp(l0, l1) = max(l0, l1) + log(1 + exp(-|l1 - l0|))
    lse = jnp.maximum(l0, l1) + jnp.log(1.0 + jnp.exp(-jnp.abs(d)))
    labels = labels_ref[...]
    picked = jnp.where(labels == 1, l1, l0)
    valid = labels != ignore_index
    loss_ref[...] = jnp.where(valid, lse - picked, 0.0)   # per-row loss; reduced in wrapper

    # --- preds_cls = argmax over the 2 classes (strict > == first occurrence) ---
    preds_cls_ref[...] = jnp.where(d > 0.0, jnp.int32(1), jnp.int32(0))

    # --- positive logit column; per-group argmax finishes in the wrapper ---
    pos_ref[...] = l1


def _pick_block_rows(B, max_rows, x_row_bytes, vmem_budget_bytes=32 << 20):
    """Pick the batch block size.

    Multiple of 8 (sublane tile), double-buffered x block fits `vmem_budget_bytes`,
    and (when B allows) at least 2 grid blocks so v7x can shard the "parallel"
    batch axis across both TensorCores.  bm does NOT have to divide B (cdiv grid).
    """
    unit = 8
    if B <= unit:
        return B                                           # full-dim tiny block
    cap = max(unit, (vmem_budget_bytes // (2 * x_row_bytes)) // unit * unit)
    bm = min(max_rows, cap, B)
    bm = max(unit, (bm // unit) * unit)
    if bm >= B and B >= 2 * unit:
        # A single block would cover the whole batch: split into two blocks so
        # the second v7x TensorCore has work (noise on single-TC v5e/v6e).
        half = -(-B // 2)
        bm = max(unit, (-(-half // unit)) * unit)
    return bm


def classify_head(x, w, b, labels, num_choices, *, max_block_rows=2048,
                  ignore_index=-100):
    """Fused linear + CE-loss + per-row argmax head.

    x:      [B, H] hidden states (bf16 or f32; cast to bf16 in VMEM for the MXU)
    w:      [H, 2] classifier weight (transposed vs PyTorch nn.Linear)
    b:      [2]    classifier bias
    labels: [B]    int class labels in {0, 1} (ignore_index rows excluded from loss)
    Returns (loss f32 scalar, preds [B // num_choices] i32, preds_cls [B] i32).
    """
    B, H = x.shape
    C = w.shape[1]
    assert C == 2, "classifier head is nn.Linear(hidden_size, 2)"
    assert B % num_choices == 0
    G = B // num_choices

    bm = _pick_block_rows(B, max_block_rows, H * x.dtype.itemsize)
    nb = pl.cdiv(B, bm)

    # Explicit VMEM limit: double-buffered x / labels / outputs + resident w.
    x_blk = bm * H * x.dtype.itemsize
    io_blk = bm * (4 + 4 + 4 + 4)          # labels + loss + preds_cls + pos per row
    need = 2 * (x_blk + io_blk) + H * C * w.dtype.itemsize + (1 << 20)
    vmem_limit = int(min(max(need, 16 << 20), 48 << 20))

    kernel = functools.partial(_head_kernel, ignore_index)
    loss_rows, preds_cls, pos_logits = pl.pallas_call(
        kernel,
        grid=(nb,),
        in_specs=[
            pl.BlockSpec((bm, H), lambda i: (i, 0)),   # x block (pipelined)
            pl.BlockSpec((H, C), lambda i: (0, 0)),    # w stays resident
            pl.BlockSpec((1, C), lambda i: (0, 0)),    # bias stays resident
            pl.BlockSpec((bm, 1), lambda i: (i, 0)),   # labels block
        ],
        out_specs=(
            pl.BlockSpec((bm, 1), lambda i: (i, 0)),   # per-row loss
            pl.BlockSpec((bm, 1), lambda i: (i, 0)),   # preds_cls
            pl.BlockSpec((bm, 1), lambda i: (i, 0)),   # positive logit column
        ),
        out_shape=(
            jax.ShapeDtypeStruct((B, 1), jnp.float32),
            jax.ShapeDtypeStruct((B, 1), jnp.int32),
            jax.ShapeDtypeStruct((B, 1), jnp.float32),
        ),
        compiler_params=pltpu.CompilerParams(
            dimension_semantics=("parallel",),
            vmem_limit_bytes=vmem_limit),
    )(x, w, b.reshape(1, C).astype(jnp.float32),
      labels.reshape(B, 1).astype(jnp.int32))

    # Finish CrossEntropyLoss 'mean' reduction over non-ignored rows (tiny XLA op).
    valid = labels.astype(jnp.int32) != ignore_index
    loss = jnp.sum(loss_rows) / jnp.sum(valid).astype(jnp.float32)
    # Per-group argmax of the positive logit (B floats; trivial XLA op).
    preds = jnp.argmax(pos_logits[:, 0].reshape(G, num_choices),
                       axis=1).astype(jnp.int32)
    return loss, preds, preds_cls[:, 0]


def _reference(x, w, b, labels, num_choices, ignore_index=-100):
    """Pure-JAX reference with the same bf16 rounding / f32 accumulate as the kernel."""
    logits = jnp.dot(x.astype(jnp.bfloat16), w.astype(jnp.bfloat16),
                     preferred_element_type=jnp.float32) + b[None, :].astype(jnp.float32)
    lse = jax.nn.logsumexp(logits, axis=1)
    lab = labels.astype(jnp.int32)
    picked = jnp.take_along_axis(logits, jnp.clip(lab, 0, 1)[:, None], axis=1)[:, 0]
    valid = lab != ignore_index
    loss = jnp.sum(jnp.where(valid, lse - picked, 0.0)) / jnp.sum(valid)
    preds_cls = jnp.argmax(logits, axis=1).astype(jnp.int32)
    preds = jnp.argmax(logits[:, 1].reshape(-1, num_choices),
                       axis=1).astype(jnp.int32)
    return loss, preds, preds_cls


if __name__ == "__main__":
    H = 1024          # Model.hidden_size
    C = 2             # nn.Linear(hidden_size, 2)

    def run_case(B, num_choices, max_block_rows, x_dtype, with_ignore, key):
        kx, kw, kl = jax.random.split(key, 3)
        x = jax.random.normal(kx, (B, H), dtype=jnp.float32).astype(x_dtype)
        w = jax.random.normal(kw, (H, C), dtype=jnp.float32) * 0.02
        b = jnp.zeros((C,), dtype=jnp.float32)
        labels = jax.random.randint(kl, (B,), 0, C, dtype=jnp.int32)
        if with_ignore:
            labels = labels.at[1].set(-100)   # exercise ignore_index=-100

        loss, preds, preds_cls = classify_head(
            x, w, b, labels, num_choices, max_block_rows=max_block_rows)
        jax.block_until_ready((loss, preds, preds_cls))

        loss_r, preds_r, preds_cls_r = _reference(x, w, b, labels, num_choices)
        assert jnp.allclose(loss, loss_r, rtol=1e-4, atol=1e-4), (loss, loss_r)
        assert jnp.array_equal(preds_cls, preds_cls_r), (preds_cls, preds_cls_r)
        assert jnp.array_equal(preds, preds_r), (preds, preds_r)

    key = jax.random.PRNGKey(0)
    k1, k2, k3 = jax.random.split(key, 3)
    # Single tiny block, bf16 activations (no-op in-kernel cast).
    run_case(B=8, num_choices=4, max_block_rows=1024,
             x_dtype=jnp.bfloat16, with_ignore=False, key=k1)
    # Two pipelined "parallel" blocks, f32 activations (in-VMEM cast path),
    # plus an ignore_index=-100 label.
    run_case(B=64, num_choices=4, max_block_rows=32,
             x_dtype=jnp.float32, with_ignore=True, key=k2)
    # Non-divisible batch: cdiv grid with a clipped partial tail block (32 + 8).
    run_case(B=40, num_choices=4, max_block_rows=32,
             x_dtype=jnp.bfloat16, with_ignore=False, key=k3)

    print("KERNEL_OK")
</pallas_src>

<mosaic_0001>
module attributes {stable_mosaic.version = 11 : i64} {
  func.func @_head_kernel(%arg0: i32, %arg1: memref<8x1024xbf16, #tpu.memory_space<vmem>>, %arg2: memref<1024x2xf32, #tpu.memory_space<vmem>>, %arg3: memref<1x2xf32, #tpu.memory_space<vmem>>, %arg4: memref<8x1xi32, #tpu.memory_space<vmem>>, %arg5: memref<8x1xf32, #tpu.memory_space<vmem>>, %arg6: memref<8x1xi32, #tpu.memory_space<vmem>>, %arg7: memref<8x1xf32, #tpu.memory_space<vmem>>) attributes {dimension_semantics = [#tpu.dimension_semantics<parallel>], iteration_bounds = array<i64: 1>, scalar_prefetch = 0 : i64, scratch_operands = 0 : i64, tpu.core_type = #tpu.core_type<tc>, window_params = [{transform_indices = @transform_0, window_bounds = array<i64: 8, 1024>}, {pipeline_mode = #tpu.pipeline_mode<synchronous>, transform_indices = @transform_1, window_bounds = array<i64: 1024, 2>}, {pipeline_mode = #tpu.pipeline_mode<synchronous>, transform_indices = @transform_2, window_bounds = array<i64: 1, 2>}, {transform_indices = @transform_3, window_bounds = array<i64: 8, 1>}, {transform_indices = @transform_4, window_bounds = array<i64: 8, 1>}, {transform_indices = @transform_5, window_bounds = array<i64: 8, 1>}, {transform_indices = @transform_6, window_bounds = array<i64: 8, 1>}]} {
    %c0 = arith.constant 0 : index
    %c0_0 = arith.constant 0 : index
    %0 = vector.load %arg1[%c0, %c0_0] : memref<8x1024xbf16, #tpu.memory_space<vmem>>, vector<8x1024xbf16>
    %c0_1 = arith.constant 0 : index
    %c0_2 = arith.constant 0 : index
    %1 = vector.load %arg2[%c0_1, %c0_2] : memref<1024x2xf32, #tpu.memory_space<vmem>>, vector<1024x2xf32>
    %2 = arith.truncf %1 : vector<1024x2xf32> to vector<1024x2xbf16>
    %cst = arith.constant dense<0.000000e+00> : vector<8x2xf32>
    %3 = tpu.matmul %0, %2, %cst {dimension_numbers = #tpu.dot_dimension_numbers<[1], [0], [0], [1], [0, 0, 1, 1], [], []>} : vector<8x1024xbf16>, vector<1024x2xbf16>, vector<8x2xf32> -> vector<8x2xf32>
    %c0_3 = arith.constant 0 : index
    %c0_4 = arith.constant 0 : index
    %4 = vector.load %arg3[%c0_3, %c0_4] : memref<1x2xf32, #tpu.memory_space<vmem>>, vector<1x2xf32>
    %5 = vector.broadcast %4 : vector<1x2xf32> to vector<8x2xf32>
    %6 = arith.addf %3, %5 : vector<8x2xf32>
    %7 = vector.extract_strided_slice %6 {offsets = [0, 0], sizes = [8, 1], strides = [1, 1]} : vector<8x2xf32> to vector<8x1xf32>
    %8 = vector.extract_strided_slice %6 {offsets = [0, 1], sizes = [8, 1], strides = [1, 1]} : vector<8x2xf32> to vector<8x1xf32>
    %9 = arith.subf %8, %7 : vector<8x1xf32>
    %10 = arith.maximumf %7, %8 : vector<8x1xf32>
    %11 = math.absf %9 : vector<8x1xf32>
    %cst_5 = arith.constant 0.000000e+00 : f32
    %12 = vector.broadcast %cst_5 : f32 to vector<8x1xf32>
    %13 = arith.subf %12, %11 : vector<8x1xf32>
    %14 = math.exp %13 : vector<8x1xf32>
    %cst_6 = arith.constant 1.000000e+00 : f32
    %15 = vector.broadcast %cst_6 : f32 to vector<8x1xf32>
    %16 = arith.addf %15, %14 : vector<8x1xf32>
    %17 = math.log %16 : vector<8x1xf32>
    %18 = arith.addf %10, %17 : vector<8x1xf32>
    %c0_7 = arith.constant 0 : index
    %c0_8 = arith.constant 0 : index
    %19 = vector.load %arg4[%c0_7, %c0_8] : memref<8x1xi32, #tpu.memory_space<vmem>>, vector<8x1xi32>
    %c1_i32 = arith.constant 1 : i32
    %20 = vector.broadcast %c1_i32 : i32 to vector<8x1xi32>
    %21 = arith.cmpi eq, %19, %20 : vector<8x1xi32>
    %22 = arith.select %21, %8, %7 : vector<8x1xi1>, vector<8x1xf32>
    %c-100_i32 = arith.constant -100 : i32
    %23 = vector.broadcast %c-100_i32 : i32 to vector<8x1xi32>
    %24 = arith.cmpi ne, %19, %23 : vector<8x1xi32>
    %25 = arith.subf %18, %22 : vector<8x1xf32>
    %cst_9 = arith.constant 0.000000e+00 : f32
    %26 = vector.broadcast %cst_9 : f32 to vector<8x1xf32>
    %27 = arith.select %24, %25, %26 : vector<8x1xi1>, vector<8x1xf32>
    %c0_10 = arith.constant 0 : index
    %c0_11 = arith.constant 0 : index
    %28 = vector.load %arg5[%c0_10, %c0_11] : memref<8x1xf32, #tpu.memory_space<vmem>>, vector<8x1xf32>
    tpu.vector_store %arg5[%c0_10, %c0_11], %27 {strides = array<i32>} : memref<8x1xf32, #tpu.memory_space<vmem>>, vector<8x1xf32>,
    %cst_12 = arith.constant 0.000000e+00 : f32
    %29 = vector.broadcast %cst_12 : f32 to vector<8x1xf32>
    %30 = arith.cmpf ogt, %9, %29 : vector<8x1xf32>
    %c1_i32_13 = arith.constant 1 : i32
    %c0_i32 = arith.constant 0 : i32
    %31 = vector.broadcast %c1_i32_13 : i32 to vector<8x1xi32>
    %32 = vector.broadcast %c0_i32 : i32 to vector<8x1xi32>
    %33 = arith.select %30, %31, %32 : vector<8x1xi1>, vector<8x1xi32>
    %c0_14 = arith.constant 0 : index
    %c0_15 = arith.constant 0 : index
    %34 = vector.load %arg6[%c0_14, %c0_15] : memref<8x1xi32, #tpu.memory_space<vmem>>, vector<8x1xi32>
    tpu.vector_store %arg6[%c0_14, %c0_15], %33 {strides = array<i32>} : memref<8x1xi32, #tpu.memory_space<vmem>>, vector<8x1xi32>,
    %c0_16 = arith.constant 0 : index
    %c0_17 = arith.constant 0 : index
    %35 = vector.load %arg7[%c0_16, %c0_17] : memref<8x1xf32, #tpu.memory_space<vmem>>, vector<8x1xf32>
    tpu.vector_store %arg7[%c0_16, %c0_17], %8 {strides = array<i32>} : memref<8x1xf32, #tpu.memory_space<vmem>>, vector<8x1xf32>,
    return
  }
  func.func @transform_0(%arg0: i32) -> (i32, i32) {
    %c0_i32 = arith.constant 0 : i32
    %c0_i32_0 = arith.constant 0 : i32
    return %arg0, %c0_i32 : i32, i32
  }
  func.func @transform_1(%arg0: i32) -> (i32, i32) {
    %c0_i32 = arith.constant 0 : i32
    %c0_i32_0 = arith.constant 0 : i32
    %c0_i32_1 = arith.constant 0 : i32
    return %c0_i32, %c0_i32_0 : i32, i32
  }
  func.func @transform_2(%arg0: i32) -> (i32, i32) {
    %c0_i32 = arith.constant 0 : i32
    %c0_i32_0 = arith.constant 0 : i32
    %c0_i32_1 = arith.constant 0 : i32
    return %c0_i32, %c0_i32_0 : i32, i32
  }
  func.func @transform_3(%arg0: i32) -> (i32, i32) {
    %c0_i32 = arith.constant 0 : i32
    %c0_i32_0 = arith.constant 0 : i32
    return %arg0, %c0_i32 : i32, i32
  }
  func.func @transform_4(%arg0: i32) -> (i32, i32) {
    %c0_i32 = arith.constant 0 : i32
    %c0_i32_0 = arith.constant 0 : i32
    return %arg0, %c0_i32 : i32, i32
  }
  func.func @transform_5(%arg0: i32) -> (i32, i32) {
    %c0_i32 = arith.constant 0 : i32
    %c0_i32_0 = arith.constant 0 : i32
    return %arg0, %c0_i32 : i32, i32
  }
  func.func @transform_6(%arg0: i32) -> (i32, i32) {
    %c0_i32 = arith.constant 0 : i32
    %c0_i32_0 = arith.constant 0 : i32
    return %arg0, %c0_i32 : i32, i32
  }
}

</mosaic_0001>

<llo_original>
// kernel: tpu_custom_call.1
$region0: #{tpu_custom_call.1}
  #allocation0 [shape = 'u32[]', space=smem, size = 0x4, offset = 0x4, fixed_abs, tag = 'smem constant byte address 0x4 - core index']
  #allocation1 [shape = 'u32[72,128]{1,0:T(1,128)}', space=vmem, size = 0x9000, scoped, tag = 'internal scratch']
  %s0 = inlined_call_operand.vmem [shape: bf16[8,1024], index: 0, kind: input, shape index: {}]
  %s1 = inlined_call_operand.vmem [shape: f32[1024,2], index: 1, kind: input, shape index: {}]
  %s2 = inlined_call_operand.vmem [shape: f32[1,2], index: 2, kind: input, shape index: {}]
  %s3 = inlined_call_operand.vmem [shape: s32[8,1], index: 3, kind: input, shape index: {}]
  %s4 = inlined_call_operand.vmem [shape: f32[8,1], index: 4, kind: output, shape index: {0}]
  %s5 = inlined_call_operand.vmem [shape: s32[8,1], index: 5, kind: output, shape index: {1}]
  %s6 = inlined_call_operand.vmem [shape: f32[8,1], index: 6, kind: output, shape index: {2}]
  %7 = xla_tuple %s4, %s5, %s6
  %s8 = sld [smem:[#allocation0]]
  $region42: #{tpu_custom_call.1} parent=0
    _
  %s10 = ssub.s32 1, %s8
  %s11 = scalar_select 0, %s10, %s8
  // Predicated region
  $region2: #{tpu_custom_call.1} parent=0 // pred_check
    _
  $region3: #{tpu_custom_call.1} parent=0 // pred_check_branch
    %13 = sbr.rel (0) target = $region5
  $region4: #{tpu_custom_call.1} parent=0 // pred_region
    _
  $region5: #{tpu_custom_call.1} parent=0 // pred_fallthru
    _
  // Predicated region
  $region6: #{tpu_custom_call.1} parent=0 // pred_check
    _
  $region7: #{tpu_custom_call.1} parent=0 // pred_check_branch
    %15 = sbr.rel (0) target = $region9
  $region8: #{tpu_custom_call.1} parent=0 // pred_region
    _
  $region9: #{tpu_custom_call.1} parent=0 // pred_fallthru
    _
  // Predicated region
  $region10: #{tpu_custom_call.1} parent=0 // pred_check
    _
  $region11: #{tpu_custom_call.1} parent=0 // pred_check_branch
    %17 = sbr.rel (0) target = $region13
  $region12: #{tpu_custom_call.1} parent=0 // pred_region
    _
  $region13: #{tpu_custom_call.1} parent=0 // pred_fallthru
    _
  // Predicated region
  $region14: #{tpu_custom_call.1} parent=0 // pred_check
    _
  $region15: #{tpu_custom_call.1} parent=0 // pred_check_branch
    %19 = sbr.rel (0) target = $region17
  $region16: #{tpu_custom_call.1} parent=0 // pred_region
    _
  $region17: #{tpu_custom_call.1} parent=0 // pred_fallthru
    _
  %v20 = vld [vmem:[%s0] sm:$0xff]
  %v21 = vld [vmem:[%s0 + $0x8] sm:$0xff]
  %v22 = vld [vmem:[%s0 + $0x10] sm:$0xff]
  %v23 = vld [vmem:[%s0 + $0x18] sm:$0xff]
  %v24 = vld [vmem:[%s1] sm:$0xff]
  %v25 = vld [vmem:[%s1 + $0x8] sm:$0xff]
  %v26 = vld [vmem:[%s1 + $0x10] sm:$0xff]
  %v27 = vld [vmem:[%s1 + $0x18] sm:$0xff]
  %v28 = vld [vmem:[%s1 + $0x20] sm:$0xff]
  %v29 = vld [vmem:[%s1 + $0x28] sm:$0xff]
  %v30 = vld [vmem:[%s1 + $0x30] sm:$0xff]
  %v31 = vld [vmem:[%s1 + $0x38] sm:$0xff]
  %v32 = vld [vmem:[%s1 + $0x40] sm:$0xff]
  %v33 = vld [vmem:[%s1 + $0x48] sm:$0xff]
  %v34 = vld [vmem:[%s1 + $0x50] sm:$0xff]
  %v35 = vld [vmem:[%s1 + $0x58] sm:$0xff]
  %v36 = vld [vmem:[%s1 + $0x60] sm:$0xff]
  %v37 = vld [vmem:[%s1 + $0x68] sm:$0xff]
  %v38 = vld [vmem:[%s1 + $0x70] sm:$0xff]
  %v39 = vld [vmem:[%s1 + $0x78] sm:$0xff]
  %v40 = vld [vmem:[%s1 + $0x80] sm:$0xff]
  %v41 = vld [vmem:[%s1 + $0x88] sm:$0xff]
  %v42 = vld [vmem:[%s1 + $0x90] sm:$0xff]
  %v43 = vld [vmem:[%s1 + $0x98] sm:$0xff]
  %v44 = vld [vmem:[%s1 + $0xa0] sm:$0xff]
  %v45 = vld [vmem:[%s1 + $0xa8] sm:$0xff]
  %v46 = vld [vmem:[%s1 + $0xb0] sm:$0xff]
  %v47 = vld [vmem:[%s1 + $0xb8] sm:$0xff]
  %v48 = vld [vmem:[%s1 + $0xc0] sm:$0xff]
  %v49 = vld [vmem:[%s1 + $0xc8] sm:$0xff]
  %v50 = vld [vmem:[%s1 + $0xd0] sm:$0xff]
  %v51 = vld [vmem:[%s1 + $0xd8] sm:$0xff]
  %v52 = vld [vmem:[%s1 + $0xe0] sm:$0xff]
  %v53 = vld [vmem:[%s1 + $0xe8] sm:$0xff]
  %v54 = vld [vmem:[%s1 + $0xf0] sm:$0xff]
  %v55 = vld [vmem:[%s1 + $0xf8] sm:$0xff]
  %v56 = vld [vmem:[%s1 + $0x100] sm:$0xff]
  %v57 = vld [vmem:[%s1 + $0x108] sm:$0xff]
  %v58 = vld [vmem:[%s1 + $0x110] sm:$0xff]
  %v59 = vld [vmem:[%s1 + $0x118] sm:$0xff]
  %v60 = vld [vmem:[%s1 + $0x120] sm:$0xff]
  %v61 = vld [vmem:[%s1 + $0x128] sm:$0xff]
  %v62 = vld [vmem:[%s1 + $0x130] sm:$0xff]
  %v63 = vld [vmem:[%s1 + $0x138] sm:$0xff]
  %v64 = vld [vmem:[%s1 + $0x140] sm:$0xff]
  %v65 = vld [vmem:[%s1 + $0x148] sm:$0xff]
  %v66 = vld [vmem:[%s1 + $0x150] sm:$0xff]
  %v67 = vld [vmem:[%s1 + $0x158] sm:$0xff]
  %v68 = vld [vmem:[%s1 + $0x160] sm:$0xff]
  %v69 = vld [vmem:[%s1 + $0x168] sm:$0xff]
  %v70 = vld [vmem:[%s1 + $0x170] sm:$0xff]
  %v71 = vld [vmem:[%s1 + $0x178] sm:$0xff]
  %v72 = vld [vmem:[%s1 + $0x180] sm:$0xff]
  %v73 = vld [vmem:[%s1 + $0x188] sm:$0xff]
  %v74 = vld [vmem:[%s1 + $0x190] sm:$0xff]
  %v75 = vld [vmem:[%s1 + $0x198] sm:$0xff]
  %v76 = vld [vmem:[%s1 + $0x1a0] sm:$0xff]
  %v77 = vld [vmem:[%s1 + $0x1a8] sm:$0xff]
  %v78 = vld [vmem:[%s1 + $0x1b0] sm:$0xff]
  %v79 = vld [vmem:[%s1 + $0x1b8] sm:$0xff]
  %v80 = vld [vmem:[%s1 + $0x1c0] sm:$0xff]
  %v81 = vld [vmem:[%s1 + $0x1c8] sm:$0xff]
  %v82 = vld [vmem:[%s1 + $0x1d0] sm:$0xff]
  %v83 = vld [vmem:[%s1 + $0x1d8] sm:$0xff]
  %v84 = vld [vmem:[%s1 + $0x1e0] sm:$0xff]
  %v85 = vld [vmem:[%s1 + $0x1e8] sm:$0xff]
  %v86 = vld [vmem:[%s1 + $0x1f0] sm:$0xff]
  %v87 = vld [vmem:[%s1 + $0x1f8] sm:$0xff]
  %v88 = vld [vmem:[%s1 + $0x200] sm:$0xff]
  %v89 = vld [vmem:[%s1 + $0x208] sm:$0xff]
  %v90 = vld [vmem:[%s1 + $0x210] sm:$0xff]
  %v91 = vld [vmem:[%s1 + $0x218] sm:$0xff]
  %v92 = vld [vmem:[%s1 + $0x220] sm:$0xff]
  %v93 = vld [vmem:[%s1 + $0x228] sm:$0xff]
  %v94 = vld [vmem:[%s1 + $0x230] sm:$0xff]
  %v95 = vld [vmem:[%s1 + $0x238] sm:$0xff]
  %v96 = vld [vmem:[%s1 + $0x240] sm:$0xff]
  %v97 = vld [vmem:[%s1 + $0x248] sm:$0xff]
  %v98 = vld [vmem:[%s1 + $0x250] sm:$0xff]
  %v99 = vld [vmem:[%s1 + $0x258] sm:$0xff]
  %v100 = vld [vmem:[%s1 + $0x260] sm:$0xff]
  %v101 = vld [vmem:[%s1 + $0x268] sm:$0xff]
  %v102 = vld [vmem:[%s1 + $0x270] sm:$0xff]
  %v103 = vld [vmem:[%s1 + $0x278] sm:$0xff]
  %v104 = vld [vmem:[%s1 + $0x280] sm:$0xff]
  %v105 = vld [vmem:[%s1 + $0x288] sm:$0xff]
  %v106 = vld [vmem:[%s1 + $0x290] sm:$0xff]
  %v107 = vld [vmem:[%s1 + $0x298] sm:$0xff]
  %v108 = vld [vmem:[%s1 + $0x2a0] sm:$0xff]
  %v109 = vld [vmem:[%s1 + $0x2a8] sm:$0xff]
  %v110 = vld [vmem:[%s1 + $0x2b0] sm:$0xff]
  %v111 = vld [vmem:[%s1 + $0x2b8] sm:$0xff]
  %v112 = vld [vmem:[%s1 + $0x2c0] sm:$0xff]
  %v113 = vld [vmem:[%s1 + $0x2c8] sm:$0xff]
  %v114 = vld [vmem:[%s1 + $0x2d0] sm:$0xff]
  %v115 = vld [vmem:[%s1 + $0x2d8] sm:$0xff]
  %v116 = vld [vmem:[%s1 + $0x2e0] sm:$0xff]
  %v117 = vld [vmem:[%s1 + $0x2e8] sm:$0xff]
  %v118 = vld [vmem:[%s1 + $0x2f0] sm:$0xff]
  %v119 = vld [vmem:[%s1 + $0x2f8] sm:$0xff]
  %v120 = vld [vmem:[%s1 + $0x300] sm:$0xff]
  %v121 = vld [vmem:[%s1 + $0x308] sm:$0xff]
  %v122 = vld [vmem:[%s1 + $0x310] sm:$0xff]
  %v123 = vld [vmem:[%s1 + $0x318] sm:$0xff]
  %v124 = vld [vmem:[%s1 + $0x320] sm:$0xff]
  %v125 = vld [vmem:[%s1 + $0x328] sm:$0xff]
  %v126 = vld [vmem:[%s1 + $0x330] sm:$0xff]
  %v127 = vld [vmem:[%s1 + $0x338] sm:$0xff]
  %v128 = vld [vmem:[%s1 + $0x340] sm:$0xff]
  %v129 = vld [vmem:[%s1 + $0x348] sm:$0xff]
  %v130 = vld [vmem:[%s1 + $0x350] sm:$0xff]
  %v131 = vld [vmem:[%s1 + $0x358] sm:$0xff]
  %v132 = vld [vmem:[%s1 + $0x360] sm:$0xff]
  %v133 = vld [vmem:[%s1 + $0x368] sm:$0xff]
  %v134 = vld [vmem:[%s1 + $0x370] sm:$0xff]
  %v135 = vld [vmem:[%s1 + $0x378] sm:$0xff]
  %v136 = vld [vmem:[%s1 + $0x380] sm:$0xff]
  %v137 = vld [vmem:[%s1 + $0x388] sm:$0xff]
  %v138 = vld [vmem:[%s1 + $0x390] sm:$0xff]
  %v139 = vld [vmem:[%s1 + $0x398] sm:$0xff]
  %v140 = vld [vmem:[%s1 + $0x3a0] sm:$0xff]
  %v141 = vld [vmem:[%s1 + $0x3a8] sm:$0xff]
  %v142 = vld [vmem:[%s1 + $0x3b0] sm:$0xff]
  %v143 = vld [vmem:[%s1 + $0x3b8] sm:$0xff]
  %v144 = vld [vmem:[%s1 + $0x3c0] sm:$0xff]
  %v145 = vld [vmem:[%s1 + $0x3c8] sm:$0xff]
  %v146 = vld [vmem:[%s1 + $0x3d0] sm:$0xff]
  %v147 = vld [vmem:[%s1 + $0x3d8] sm:$0xff]
  %v148 = vld [vmem:[%s1 + $0x3e0] sm:$0xff]
  %v149 = vld [vmem:[%s1 + $0x3e8] sm:$0xff]
  %v150 = vld [vmem:[%s1 + $0x3f0] sm:$0xff]
  %v151 = vld [vmem:[%s1 + $0x3f8] sm:$0xff]
  %v152 = vpack.c.bf16 %v25, %v24
  %v153 = vpack.c.bf16 %v27, %v26
  %v154 = vpack.c.bf16 %v29, %v28
  %v155 = vpack.c.bf16 %v31, %v30
  %v156 = vpack.c.bf16 %v33, %v32
  %v157 = vpack.c.bf16 %v35, %v34
  %v158 = vpack.c.bf16 %v37, %v36
  %v159 = vpack.c.bf16 %v39, %v38
  %v160 = vpack.c.bf16 %v41, %v40
  %v161 = vpack.c.bf16 %v43, %v42
  %v162 = vpack.c.bf16 %v45, %v44
  %v163 = vpack.c.bf16 %v47, %v46
  %v164 = vpack.c.bf16 %v49, %v48
  %v165 = vpack.c.bf16 %v51, %v50
  %v166 = vpack.c.bf16 %v53, %v52
  %v167 = vpack.c.bf16 %v55, %v54
  %v168 = vpack.c.bf16 %v57, %v56
  %v169 = vpack.c.bf16 %v59, %v58
  %v170 = vpack.c.bf16 %v61, %v60
  %v171 = vpack.c.bf16 %v63, %v62
  %v172 = vpack.c.bf16 %v65, %v64
  %v173 = vpack.c.bf16 %v67, %v66
  %v174 = vpack.c.bf16 %v69, %v68
  %v175 = vpack.c.bf16 %v71, %v70
  %v176 = vpack.c.bf16 %v73, %v72
  %v177 = vpack.c.bf16 %v75, %v74
  %v178 = vpack.c.bf16 %v77, %v76
  %v179 = vpack.c.bf16 %v79, %v78
  %v180 = vpack.c.bf16 %v81, %v80
  %v181 = vpack.c.bf16 %v83, %v82
  %v182 = vpack.c.bf16 %v85, %v84
  %v183 = vpack.c.bf16 %v87, %v86
  %v184 = vpack.c.bf16 %v89, %v88
  %v185 = vpack.c.bf16 %v91, %v90
  %v186 = vpack.c.bf16 %v93, %v92
  %v187 = vpack.c.bf16 %v95, %v94
  %v188 = vpack.c.bf16 %v97, %v96
  %v189 = vpack.c.bf16 %v99, %v98
  %v190 = vpack.c.bf16 %v101, %v100
  %v191 = vpack.c.bf16 %v103, %v102
  %v192 = vpack.c.bf16 %v105, %v104
  %v193 = vpack.c.bf16 %v107, %v106
  %v194 = vpack.c.bf16 %v109, %v108
  %v195 = vpack.c.bf16 %v111, %v110
  %v196 = vpack.c.bf16 %v113, %v112
  %v197 = vpack.c.bf16 %v115, %v114
  %v198 = vpack.c.bf16 %v117, %v116
  %v199 = vpack.c.bf16 %v119, %v118
  %v200 = vpack.c.bf16 %v121, %v120
  %v201 = vpack.c.bf16 %v123, %v122
  %v202 = vpack.c.bf16 %v125, %v124
  %v203 = vpack.c.bf16 %v127, %v126
  %v204 = vpack.c.bf16 %v129, %v128
  %v205 = vpack.c.bf16 %v131, %v130
  %v206 = vpack.c.bf16 %v133, %v132
  %v207 = vpack.c.bf16 %v135, %v134
  %v208 = vpack.c.bf16 %v137, %v136
  %v209 = vpack.c.bf16 %v139, %v138
  %v210 = vpack.c.bf16 %v141, %v140
  %v211 = vpack.c.bf16 %v143, %v142
  %v212 = vpack.c.bf16 %v145, %v144
  %v213 = vpack.c.bf16 %v147, %v146
  %v214 = vpack.c.bf16 %v149, %v148
  %v215 = vpack.c.bf16 %v151, %v150
  %v216 = vld [vmem:[%s2] sm:$0x1]
  %v218 = vperm.slane %v216, 0
  %v224 = vunpack.c.l.b16 %v20
  %v225 = vunpack.c.h.b16 %v20
  %v226 = vunpack.c.l.b16 %v21
  %v227 = vunpack.c.h.b16 %v21
  %v228 = vunpack.c.l.b16 %v22
  %v229 = vunpack.c.h.b16 %v22
  %v230 = vunpack.c.l.b16 %v23
  %v231 = vunpack.c.h.b16 %v23
  %v232 = vpack.c.b16 %v224, %v224
  %v233 = vpack.c.b16 %v225, %v225
  %v234 = vpack.c.b16 %v226, %v226
  %v235 = vpack.c.b16 %v227, %v227
  %v236 = vpack.c.b16 %v228, %v228
  %v237 = vpack.c.b16 %v229, %v229
  %v238 = vpack.c.b16 %v230, %v230
  %v239 = vpack.c.b16 %v231, %v231
  %248 = vmatpush.bf16.msra.mxu0 %v159
  %249 = vmatpush.bf16.msra.mxu0 %v158
  %250 = vmatpush.bf16.msra.mxu0 %v157
  %251 = vmatpush.bf16.msra.mxu0 %v156
  %252 = vmatpush.bf16.msra.mxu0 %v155
  %253 = vmatpush.bf16.msra.mxu0 %v154
  %254 = vmatpush.bf16.msra.mxu0 %v153
  %255 = vmatpush.bf16.msra.mxu0 %v152
  %256 = vmatmul.bf16.gmra.mxu0 %v232
  %v257 = vpop.f32.mrf.mxu0
  %v258 = vadd.f32 %v218, %v257
  %v259 = vpop.f32.mrf.mxu0
  %260 = vdwg.mxu0
  %261 = vmatpush.bf16.msra.mxu0 %v167
  %262 = vmatpush.bf16.msra.mxu0 %v166
  %263 = vmatpush.bf16.msra.mxu0 %v165
  %264 = vmatpush.bf16.msra.mxu0 %v164
  %265 = vmatpush.bf16.msra.mxu0 %v163
  %266 = vmatpush.bf16.msra.mxu0 %v162
  %267 = vmatpush.bf16.msra.mxu0 %v161
  %268 = vmatpush.bf16.msra.mxu0 %v160
  %269 = vmatmul.bf16.gmra.mxu0 %v233
  %v270 = vpop.f32.mrf.mxu0
  %v271 = vadd.f32 %v258, %v270
  %v272 = vpop.f32.mrf.mxu0
  %273 = vdwg.mxu0
  %274 = vmatpush.bf16.msra.mxu0 %v175
  %275 = vmatpush.bf16.msra.mxu0 %v174
  %276 = vmatpush.bf16.msra.mxu0 %v173
  %277 = vmatpush.bf16.msra.mxu0 %v172
  %278 = vmatpush.bf16.msra.mxu0 %v171
  %279 = vmatpush.bf16.msra.mxu0 %v170
  %280 = vmatpush.bf16.msra.mxu0 %v169
  %281 = vmatpush.bf16.msra.mxu0 %v168
  %282 = vmatmul.bf16.gmra.mxu0 %v234
  %v283 = vpop.f32.mrf.mxu0
  %v284 = vadd.f32 %v271, %v283
  %v285 = vpop.f32.mrf.mxu0
  %286 = vdwg.mxu0
  %287 = vmatpush.bf16.msra.mxu0 %v183
  %288 = vmatpush.bf16.msra.mxu0 %v182
  %289 = vmatpush.bf16.msra.mxu0 %v181
  %290 = vmatpush.bf16.msra.mxu0 %v180
  %291 = vmatpush.bf16.msra.mxu0 %v179
  %292 = vmatpush.bf16.msra.mxu0 %v178
  %293 = vmatpush.bf16.msra.mxu0 %v177
  %294 = vmatpush.bf16.msra.mxu0 %v176
  %295 = vmatmul.bf16.gmra.mxu0 %v235
  %v296 = vpop.f32.mrf.mxu0
  %v297 = vadd.f32 %v284, %v296
  %v298 = vpop.f32.mrf.mxu0
  %299 = vdwg.mxu0
  %300 = vmatpush.bf16.msra.mxu0 %v191
  %301 = vmatpush.bf16.msra.mxu0 %v190
  %302 = vmatpush.bf16.msra.mxu0 %v189
  %303 = vmatpush.bf16.msra.mxu0 %v188
  %304 = vmatpush.bf16.msra.mxu0 %v187
  %305 = vmatpush.bf16.msra.mxu0 %v186
  %306 = vmatpush.bf16.msra.mxu0 %v185
  %307 = vmatpush.bf16.msra.mxu0 %v184
  %308 = vmatmul.bf16.gmra.mxu0 %v236
  %v309 = vpop.f32.mrf.mxu0
  %v310 = vadd.f32 %v297, %v309
  %v311 = vpop.f32.mrf.mxu0
  %312 = vdwg.mxu0
  %313 = vmatpush.bf16.msra.mxu0 %v199
  %314 = vmatpush.bf16.msra.mxu0 %v198
  %315 = vmatpush.bf16.msra.mxu0 %v197
  %316 = vmatpush.bf16.msra.mxu0 %v196
  %317 = vmatpush.bf16.msra.mxu0 %v195
  %318 = vmatpush.bf16.msra.mxu0 %v194
  %319 = vmatpush.bf16.msra.mxu0 %v193
  %320 = vmatpush.bf16.msra.mxu0 %v192
  %321 = vmatmul.bf16.gmra.mxu0 %v237
  %v322 = vpop.f32.mrf.mxu0
  %v323 = vadd.f32 %v310, %v322
  %v324 = vpop.f32.mrf.mxu0
  %325 = vdwg.mxu0
  %326 = vmatpush.bf16.msra.mxu0 %v207
  %327 = vmatpush.bf16.msra.mxu0 %v206
  %328 = vmatpush.bf16.msra.mxu0 %v205
  %329 = vmatpush.bf16.msra.mxu0 %v204
  %330 = vmatpush.bf16.msra.mxu0 %v203
  %331 = vmatpush.bf16.msra.mxu0 %v202
  %332 = vmatpush.bf16.msra.mxu0 %v201
  %333 = vmatpush.bf16.msra.mxu0 %v200
  %334 = vmatmul.bf16.gmra.mxu0 %v238
  %v335 = vpop.f32.mrf.mxu0
  %v336 = vadd.f32 %v323, %v335
  %v337 = vpop.f32.mrf.mxu0
  %338 = vdwg.mxu0
  %339 = vmatpush.bf16.msra.mxu0 %v215
  %340 = vmatpush.bf16.msra.mxu0 %v214
  %341 = vmatpush.bf16.msra.mxu0 %v213
  %342 = vmatpush.bf16.msra.mxu0 %v212
  %343 = vmatpush.bf16.msra.mxu0 %v211
  %344 = vmatpush.bf16.msra.mxu0 %v210
  %345 = vmatpush.bf16.msra.mxu0 %v209
  %346 = vmatpush.bf16.msra.mxu0 %v208
  %347 = vmatmul.bf16.gmra.mxu0 %v239
  %v348 = vpop.f32.mrf.mxu0
  %v349 = vadd.f32 %v336, %v348
  %v350 = vpop.f32.mrf.mxu0
  %351 = vdwg.mxu0
  %353 = vrot.lane.b32.xlu0 %v349, 1
  %v354 = vpop.permute.xlu0 %353
  %v356 = vsub.f32 %v349, %v354
  %357 = vrot.lane.b32.xlu0 %v349, 127
  %v358 = vpop.permute.xlu0 %357
  %v360 = vmax.f32 %v349, %v358
  %v361 = vand.u32 2147483647, %v356
  %v362 = vsub.f32 0.0, %v361
  %v363 = vmul.f32 %v362, 1.442695
  %v364 = vpow.pop %v363
  %v365 = vadd.f32 %v364, 1.0
  %v366 = vlog2.pop %v365
  %v367 = vmul.f32 %v366, 0.6931472
  %369 = vrot.lane.b32.xlu0 %v367, 127
  %v370 = vpop.permute.xlu0 %369
  %v372 = vadd.f32 %v360, %v370
  %v373 = vld [vmem:[%s3] sm:$0xff]
  %vm374 = vcmp.eq.s32.totalorder %v373, 1
  %v375 = vsel %vm374, %v358, %v349
  %vm376 = vcmp.ne.s32.totalorder %v373, 4294967196
  %v377 = vsub.f32 %v372, %v375
  %v378 = vsel %vm376, %v377, 0.0
  %vm379 = vcmask 7168
  %380 = vst.msk [vmem:[%s4] sm:$0xff] %vm379, %v378
  %vm381 = vcmp.gt.f32.partialorder %v356, 0.0
  %v382 = vsel %vm381, 1, 0
  %383 = vrot.lane.b32.xlu0 %v382, 127
  %v384 = vpop.permute.xlu0 %383
  %385 = vst.msk [vmem:[%s5] sm:$0xff] %vm379, %v384
  %386 = vst.msk [vmem:[%s6] sm:$0xff] %vm379, %v358
  // Predicated region
  $region18: #{tpu_custom_call.1} parent=0 // pred_check
    _
  $region19: #{tpu_custom_call.1} parent=0 // pred_check_branch
    %388 = sbr.rel (0) target = $region21
  $region20: #{tpu_custom_call.1} parent=0 // pred_region
    _
  $region21: #{tpu_custom_call.1} parent=0 // pred_fallthru
    _
  // Predicated region
  $region22: #{tpu_custom_call.1} parent=0 // pred_check
    _
  $region23: #{tpu_custom_call.1} parent=0 // pred_check_branch
    %390 = sbr.rel (0) target = $region25
  $region24: #{tpu_custom_call.1} parent=0 // pred_region
    _
  $region25: #{tpu_custom_call.1} parent=0 // pred_fallthru
    _
  // Predicated region
  $region26: #{tpu_custom_call.1} parent=0 // pred_check
    _
  $region27: #{tpu_custom_call.1} parent=0 // pred_check_branch
    %392 = sbr.rel (0) target = $region29
  $region28: #{tpu_custom_call.1} parent=0 // pred_region
    _
  $region29: #{tpu_custom_call.1} parent=0 // pred_fallthru
    _
  // Predicated region
  $region30: #{tpu_custom_call.1} parent=0 // pred_check
    _
  $region31: #{tpu_custom_call.1} parent=0 // pred_check_branch
    %394 = sbr.rel (0) target = $region33
  $region32: #{tpu_custom_call.1} parent=0 // pred_region
    _
  $region33: #{tpu_custom_call.1} parent=0 // pred_fallthru
    _
  // Predicated region
  $region34: #{tpu_custom_call.1} parent=0 // pred_check
    _
  $region35: #{tpu_custom_call.1} parent=0 // pred_check_branch
    %396 = sbr.rel (0) target = $region37
  $region36: #{tpu_custom_call.1} parent=0 // pred_region
    _
  $region37: #{tpu_custom_call.1} parent=0 // pred_fallthru
    _
  // Predicated region
  $region38: #{tpu_custom_call.1} parent=0 // pred_check
    _
  $region39: #{tpu_custom_call.1} parent=0 // pred_check_branch
    %398 = sbr.rel (0) target = $region41
  $region40: #{tpu_custom_call.1} parent=0 // pred_region
    _
  $region41: #{tpu_custom_call.1} parent=0 // pred_fallthru
    _

</llo_original>
